<compile_context>
chip_gen: v5e
topology: v5e:2x2
jax: 0.10.0
libtpu: 0.0.40
codegen_flags: <defaults>
</compile_context>

<pallas_src>
import jax
import jax.numpy as jnp
from jax import lax
from jax.experimental import pallas as pl
from jax.experimental.pallas import tpu as pltpu


def _round_up(x, m):
    return (x + m - 1) // m * m


def _fused_head_kernel(x_ref, w1_ref, b1_ref, w2_ref, b2_ref, o_ref):
    """Fused 2-layer MLP head on one batch tile.

      x_ref  : (TB, F)  f32   batch tile of flat inputs (F lane-dense)
      w1_ref : (F,  H)  bf16  W1 in natural (F, H) layout, resident
      b1_ref : (1,  H)  f32   first-layer bias (broadcast over batch/sublanes)
      w2_ref : (1,  H)  f32   second-layer weights (row)
      b2_ref : (1,  1)  f32   second-layer bias, SMEM scalar
      o_ref  : (TB, 1)  f32   output tile
    """
    # In-kernel bf16 pack of the f32 tile (VPU, plenty of slack) right before
    # the dot; MXU accumulates in f32.  Natural (TB,F)@(F,H): no operand
    # transpose can be materialized.
    x_bf16 = x_ref[...].astype(jnp.bfloat16)
    h = lax.dot_general(
        x_bf16, w1_ref[...],
        dimension_numbers=(((1,), (0,)), ((), ())),
        preferred_element_type=jnp.float32,
    )                                                     # (TB, H) f32
    h = jnp.maximum(h + b1_ref[...], 0.0)                 # bias + ReLU (VPU)

    # Second layer (output width 1): VPU multiply + cross-lane sum instead of
    # pushing a 1-wide result through the MXU.
    o = jnp.sum(h * w2_ref[...], axis=1, keepdims=True)   # (TB, 1)
    o_ref[...] = (o + b2_ref[0, 0]).astype(o_ref.dtype)


def _pick_batch_tile(B):
    """Batch tile size: amortize per-step overhead, keep >=2 tiles for the
    v7x megacore at mid-size B, and keep the f32 double buffer within the
    default scoped-VMEM limit on all generations (v5e/v6e/v7x)."""
    if B <= 256:
        # Single tile == full array dims: no padding, no alignment constraints.
        return B
    if B <= 2048:
        # ~Two tiles, each a multiple of 128 (keeps non-full blocks
        # (8,128)-aligned and the output-edge store cleanly maskable).
        return _round_up(pl.cdiv(B, 2), 128)
    # Large B: 4 MiB f32 tile, 8 MiB double-buffered -> fits v5e's 16 MiB
    # default scoped VMEM (and v6e/v7x 32 MiB) with no vmem_limit_bytes bump.
    return 1024


def _fused_mlp_head(x_flat, w1_bf16, b1_row, w2_row, b2):
    """y[b] = relu(x[b] @ W1 + b1) @ W2 + b2, returned as (B, 1) float32."""
    B, F = x_flat.shape
    H = w1_bf16.shape[1]

    TB = _pick_batch_tile(B)
    num_tiles = pl.cdiv(B, TB)

    return pl.pallas_call(
        _fused_head_kernel,
        out_shape=jax.ShapeDtypeStruct((B, 1), jnp.float32),
        grid=(num_tiles,),
        in_specs=[
            # Batch tile of x: marches along the batch axis (edge tile masked).
            pl.BlockSpec((TB, F), lambda i: (i, 0)),
            # Weights / biases: constant index_map -> loaded once, resident.
            pl.BlockSpec((F, H), lambda i: (0, 0)),
            pl.BlockSpec((1, H), lambda i: (0, 0)),
            pl.BlockSpec((1, H), lambda i: (0, 0)),
            # Scalar bias b2 lives in SMEM (no padded VMEM tile, no extra DMA).
            pl.BlockSpec(memory_space=pltpu.MemorySpace.SMEM),
        ],
        out_specs=pl.BlockSpec((TB, 1), lambda i: (i, 0)),
        compiler_params=pltpu.CompilerParams(
            # Batch tiles are independent -> shard across TCs on v7x megacore.
            dimension_semantics=("parallel",),
        ),
    )(x_flat, w1_bf16, b1_row, w2_row, b2)


class NetWithFlatInput:
    """JAX equivalent of `net_with_flat_input` wrapping a 2-layer MLP head."""

    def __init__(self, original_shape, hidden=32, key=jax.random.PRNGKey(42)):
        self.original_shape = tuple(original_shape)          # (B, C, H, W), NCHW
        B, C, Hs, Ws = self.original_shape
        feat = C * Hs * Ws
        k1, k2, k3, k4 = jax.random.split(key, 4)
        # Deterministic synthetic parameters (no checkpoint load), stored in
        # kernel-friendly layouts: W1 natural (F, H), biases/second layer as
        # (1, H) rows, b2 as an SMEM-able (1, 1) scalar.
        self.w1_f32 = (jax.random.normal(k1, (feat, hidden), jnp.float32)
                       / jnp.sqrt(jnp.float32(feat)))         # W1 : (F, H)
        self.w1 = self.w1_f32.astype(jnp.bfloat16)            # cast once (tiny)
        self.b1 = 0.01 * jax.random.normal(k2, (1, hidden), jnp.float32)
        self.w2 = (jax.random.normal(k3, (1, hidden), jnp.float32)
                   / jnp.sqrt(jnp.float32(hidden)))
        self.b2 = 0.01 * jax.random.normal(k4, (1, 1), jnp.float32)

    def __call__(self, x):
        # x = x.view(self.original_shape)
        x_nchw = jnp.reshape(x, self.original_shape)          # (B, C, H, W)
        # out = self.net(x)  (inner net flattens then applies the fused head)
        # TODO(synk): the wrapped `net` is arbitrary in the PyTorch module; a
        # concrete Linear->ReLU->Linear head is instantiated here.
        B = x_nchw.shape[0]
        x_flat = jnp.reshape(x_nchw, (B, -1))                 # (B, C*H*W)
        out = _fused_mlp_head(x_flat, self.w1, self.b1, self.w2, self.b2)
        # return out.view(out.shape[0], 1)
        return jnp.reshape(out, (out.shape[0], 1))


def _reference_forward(model, x):
    """Pure-JAX f32 reference of the same forward pass."""
    B = model.original_shape[0]
    x_flat = jnp.reshape(jnp.reshape(x, model.original_shape), (B, -1))
    h = jnp.maximum(x_flat @ model.w1_f32 + model.b1, 0.0)
    return (jnp.sum(h * model.w2, axis=1, keepdims=True) + model.b2[0, 0])


if __name__ == "__main__":
    B, C, H, W = 2, 4, 16, 16
    original_shape = (B, C, H, W)

    key = jax.random.PRNGKey(0)
    # The wrapper's contract: input arrives flat and gets view()'d to NCHW.
    x_flat_in = jax.random.normal(key, (B, C * H * W), jnp.float32)

    model = NetWithFlatInput(original_shape, hidden=32)
    out = model(x_flat_in)
    out = jax.block_until_ready(out)

    assert out.shape == (B, 1), out.shape
    ref = _reference_forward(model, x_flat_in)
    # Kernel uses bf16 matmul operands with f32 accumulation -> loosened
    # tolerance vs. the pure-f32 reference.
    assert jnp.allclose(out, ref, atol=2e-2, rtol=2e-2), (out, ref)

    print("KERNEL_OK")
</pallas_src>

<mosaic_0001>
module attributes {stable_mosaic.version = 11 : i64} {
  func.func @_fused_head_kernel(%arg0: i32, %arg1: memref<2x1024xf32, #tpu.memory_space<vmem>>, %arg2: memref<1024x32xbf16, #tpu.memory_space<vmem>>, %arg3: memref<1x32xf32, #tpu.memory_space<vmem>>, %arg4: memref<1x32xf32, #tpu.memory_space<vmem>>, %arg5: memref<1x1xf32, #tpu.memory_space<smem>>, %arg6: memref<2x1xf32, #tpu.memory_space<vmem>>) attributes {dimension_semantics = [#tpu.dimension_semantics<parallel>], iteration_bounds = array<i64: 1>, scalar_prefetch = 0 : i64, scratch_operands = 0 : i64, tpu.core_type = #tpu.core_type<tc>, window_params = [{transform_indices = @transform_0, window_bounds = array<i64: 2, 1024>}, {pipeline_mode = #tpu.pipeline_mode<synchronous>, transform_indices = @transform_1, window_bounds = array<i64: 1024, 32>}, {pipeline_mode = #tpu.pipeline_mode<synchronous>, transform_indices = @transform_2, window_bounds = array<i64: 1, 32>}, {pipeline_mode = #tpu.pipeline_mode<synchronous>, transform_indices = @transform_3, window_bounds = array<i64: 1, 32>}, {transform_indices = @transform_4, window_bounds = array<i64: 1, 1>}, {transform_indices = @transform_5, window_bounds = array<i64: 2, 1>}]} {
    %c0 = arith.constant 0 : index
    %c0_0 = arith.constant 0 : index
    %0 = vector.load %arg1[%c0, %c0_0] : memref<2x1024xf32, #tpu.memory_space<vmem>>, vector<2x1024xf32>
    %1 = arith.truncf %0 : vector<2x1024xf32> to vector<2x1024xbf16>
    %c0_1 = arith.constant 0 : index
    %c0_2 = arith.constant 0 : index
    %2 = vector.load %arg2[%c0_1, %c0_2] : memref<1024x32xbf16, #tpu.memory_space<vmem>>, vector<1024x32xbf16>
    %cst = arith.constant dense<0.000000e+00> : vector<2x32xf32>
    %3 = tpu.matmul %1, %2, %cst {dimension_numbers = #tpu.dot_dimension_numbers<[1], [0], [0], [1], [0, 0, 1, 1], [], []>} : vector<2x1024xbf16>, vector<1024x32xbf16>, vector<2x32xf32> -> vector<2x32xf32>
    %c0_3 = arith.constant 0 : index
    %c0_4 = arith.constant 0 : index
    %4 = vector.load %arg3[%c0_3, %c0_4] : memref<1x32xf32, #tpu.memory_space<vmem>>, vector<1x32xf32>
    %5 = vector.broadcast %4 : vector<1x32xf32> to vector<2x32xf32>
    %6 = arith.addf %3, %5 : vector<2x32xf32>
    %cst_5 = arith.constant 0.000000e+00 : f32
    %7 = vector.broadcast %cst_5 : f32 to vector<2x32xf32>
    %8 = arith.maximumf %6, %7 : vector<2x32xf32>
    %c0_6 = arith.constant 0 : index
    %c0_7 = arith.constant 0 : index
    %9 = vector.load %arg4[%c0_6, %c0_7] : memref<1x32xf32, #tpu.memory_space<vmem>>, vector<1x32xf32>
    %10 = vector.broadcast %9 : vector<1x32xf32> to vector<2x32xf32>
    %11 = arith.mulf %8, %10 : vector<2x32xf32>
    %cst_8 = arith.constant dense<0.000000e+00> : vector<2xf32>
    %12 = vector.multi_reduction <add>, %11, %cst_8 [1] : vector<2x32xf32> to vector<2xf32>
    %13 = vector.shape_cast %12 : vector<2xf32> to vector<2x1xf32>
    %c0_9 = arith.constant 0 : index
    %c0_10 = arith.constant 0 : index
    %14 = memref.load %arg5[%c0_9, %c0_10] : memref<1x1xf32, #tpu.memory_space<smem>>
    %15 = vector.broadcast %14 : f32 to vector<2x1xf32>
    %16 = arith.addf %13, %15 : vector<2x1xf32>
    %c0_11 = arith.constant 0 : index
    %c0_12 = arith.constant 0 : index
    %17 = vector.load %arg6[%c0_11, %c0_12] : memref<2x1xf32, #tpu.memory_space<vmem>>, vector<2x1xf32>
    tpu.vector_store %arg6[%c0_11, %c0_12], %16 {strides = array<i32>} : memref<2x1xf32, #tpu.memory_space<vmem>>, vector<2x1xf32>,
    return
  }
  func.func @transform_0(%arg0: i32) -> (i32, i32) {
    %c0_i32 = arith.constant 0 : i32
    %c0_i32_0 = arith.constant 0 : i32
    return %arg0, %c0_i32 : i32, i32
  }
  func.func @transform_1(%arg0: i32) -> (i32, i32) {
    %c0_i32 = arith.constant 0 : i32
    %c0_i32_0 = arith.constant 0 : i32
    %c0_i32_1 = arith.constant 0 : i32
    return %c0_i32, %c0_i32_0 : i32, i32
  }
  func.func @transform_2(%arg0: i32) -> (i32, i32) {
    %c0_i32 = arith.constant 0 : i32
    %c0_i32_0 = arith.constant 0 : i32
    %c0_i32_1 = arith.constant 0 : i32
    return %c0_i32, %c0_i32_0 : i32, i32
  }
  func.func @transform_3(%arg0: i32) -> (i32, i32) {
    %c0_i32 = arith.constant 0 : i32
    %c0_i32_0 = arith.constant 0 : i32
    %c0_i32_1 = arith.constant 0 : i32
    return %c0_i32, %c0_i32_0 : i32, i32
  }
  func.func @transform_4(%arg0: i32) -> (i32, i32) {
    %c0_i32 = arith.constant 0 : i32
    %c0_i32_0 = arith.constant 0 : i32
    %c0_i32_1 = arith.constant 0 : i32
    return %c0_i32, %c0_i32_0 : i32, i32
  }
  func.func @transform_5(%arg0: i32) -> (i32, i32) {
    %c0_i32 = arith.constant 0 : i32
    %c0_i32_0 = arith.constant 0 : i32
    return %arg0, %c0_i32 : i32, i32
  }
}

</mosaic_0001>

<llo_original>
// kernel: tpu_custom_call.1
$region0: #{tpu_custom_call.1}
  #allocation0 [shape = 'u32[]', space=smem, size = 0x4, offset = 0x4, fixed_abs, tag = 'smem constant byte address 0x4 - core index']
  #allocation1 [shape = 'u32[72,128]{1,0:T(1,128)}', space=vmem, size = 0x9000, scoped, tag = 'internal scratch']
  #allocation2 [shape = 'f32[1,1]{1,0:T(1,128)S(6)}', space=smem, size = 0x200, scoped, tag = 'scoped memory for tpu_custom_call.1']
  %s0 = inlined_call_operand.vmem [shape: f32[2,1024], index: 0, kind: input, shape index: {}]
  %s1 = inlined_call_operand.vmem [shape: bf16[1024,32], index: 1, kind: input, shape index: {}]
  %s2 = inlined_call_operand.vmem [shape: f32[1,32], index: 2, kind: input, shape index: {}]
  %s3 = inlined_call_operand.vmem [shape: f32[1,32], index: 3, kind: input, shape index: {}]
  %s4 = inlined_call_operand.<no memory space> [shape: f32[1,1], index: 4, kind: input, shape index: {}]
  %s5 = inlined_call_operand.vmem [shape: f32[2,1], index: 5, kind: output, shape index: {}]
  %s6 = sld [smem:[#allocation0]]
  $region30: #{tpu_custom_call.1} parent=0
    _
  %s8 = ssub.s32 1, %s6
  %s9 = scalar_select 0, %s8, %s6
  %10 = sst [smem:[#allocation2]] %s4
  // Predicated region
  $region2: #{tpu_custom_call.1} parent=0 // pred_check
    _
  $region3: #{tpu_custom_call.1} parent=0 // pred_check_branch
    %12 = sbr.rel (0) target = $region5
  $region4: #{tpu_custom_call.1} parent=0 // pred_region
    _
  $region5: #{tpu_custom_call.1} parent=0 // pred_fallthru
    _
  // Predicated region
  $region6: #{tpu_custom_call.1} parent=0 // pred_check
    _
  $region7: #{tpu_custom_call.1} parent=0 // pred_check_branch
    %14 = sbr.rel (0) target = $region9
  $region8: #{tpu_custom_call.1} parent=0 // pred_region
    _
  $region9: #{tpu_custom_call.1} parent=0 // pred_fallthru
    _
  // Predicated region
  $region10: #{tpu_custom_call.1} parent=0 // pred_check
    _
  $region11: #{tpu_custom_call.1} parent=0 // pred_check_branch
    %16 = sbr.rel (0) target = $region13
  $region12: #{tpu_custom_call.1} parent=0 // pred_region
    _
  $region13: #{tpu_custom_call.1} parent=0 // pred_fallthru
    _
  // Predicated region
  $region14: #{tpu_custom_call.1} parent=0 // pred_check
    _
  $region15: #{tpu_custom_call.1} parent=0 // pred_check_branch
    %18 = sbr.rel (0) target = $region17
  $region16: #{tpu_custom_call.1} parent=0 // pred_region
    _
  $region17: #{tpu_custom_call.1} parent=0 // pred_fallthru
    _
  // Predicated region
  $region18: #{tpu_custom_call.1} parent=0 // pred_check
    _
  $region19: #{tpu_custom_call.1} parent=0 // pred_check_branch
    %20 = sbr.rel (0) target = $region21
  $region20: #{tpu_custom_call.1} parent=0 // pred_region
    _
  $region21: #{tpu_custom_call.1} parent=0 // pred_fallthru
    _
  %v21 = vld [vmem:[%s0] sm:$0xff]
  %v22 = vld [vmem:[%s0 + $0x8] sm:$0xff]
  %25 = vst [vmem:[#allocation1] ss:$4 sm:$0xff] %v21
  %s26 = scalar_lea.vmem [#allocation1], 32
  %27 = vst [vmem:[%s26] ss:$4 sm:$0xff] %v22
  %v28 = vld.sshfl [vmem:[#allocation1] sm:$0xff pattern:$0x73625140]
  %v29 = vld.sshfl [vmem:[#allocation1 + $0x8] sm:$0xff pattern:$0x73625140]
  %v30 = vld.sshfl [vmem:[#allocation1 + $0x10] sm:$0xff pattern:$0x73625140]
  %v31 = vld.sshfl [vmem:[#allocation1 + $0x18] sm:$0xff pattern:$0x73625140]
  %v32 = vld.sshfl [vmem:[#allocation1 + $0x20] sm:$0xff pattern:$0x73625140]
  %v33 = vld.sshfl [vmem:[#allocation1 + $0x28] sm:$0xff pattern:$0x73625140]
  %v34 = vld.sshfl [vmem:[#allocation1 + $0x30] sm:$0xff pattern:$0x73625140]
  %v35 = vld.sshfl [vmem:[#allocation1 + $0x38] sm:$0xff pattern:$0x73625140]
  %v44 = vpack.c.bf16 %v28, %v28
  %v45 = vpack.c.bf16 %v29, %v29
  %v46 = vpack.c.bf16 %v30, %v30
  %v47 = vpack.c.bf16 %v31, %v31
  %v48 = vpack.c.bf16 %v32, %v32
  %v49 = vpack.c.bf16 %v33, %v33
  %v50 = vpack.c.bf16 %v34, %v34
  %v51 = vpack.c.bf16 %v35, %v35
  %v52 = vld [vmem:[%s1] sm:$0xf]
  %v53 = vld [vmem:[%s1 + $0x4] sm:$0xf]
  %v54 = vld [vmem:[%s1 + $0x8] sm:$0xf]
  %v55 = vld [vmem:[%s1 + $0xc] sm:$0xf]
  %v56 = vld [vmem:[%s1 + $0x10] sm:$0xf]
  %v57 = vld [vmem:[%s1 + $0x14] sm:$0xf]
  %v58 = vld [vmem:[%s1 + $0x18] sm:$0xf]
  %v59 = vld [vmem:[%s1 + $0x1c] sm:$0xf]
  %v60 = vld [vmem:[%s1 + $0x20] sm:$0xf]
  %v61 = vld [vmem:[%s1 + $0x24] sm:$0xf]
  %v62 = vld [vmem:[%s1 + $0x28] sm:$0xf]
  %v63 = vld [vmem:[%s1 + $0x2c] sm:$0xf]
  %v64 = vld [vmem:[%s1 + $0x30] sm:$0xf]
  %v65 = vld [vmem:[%s1 + $0x34] sm:$0xf]
  %v66 = vld [vmem:[%s1 + $0x38] sm:$0xf]
  %v67 = vld [vmem:[%s1 + $0x3c] sm:$0xf]
  %v68 = vld [vmem:[%s1 + $0x40] sm:$0xf]
  %v69 = vld [vmem:[%s1 + $0x44] sm:$0xf]
  %v70 = vld [vmem:[%s1 + $0x48] sm:$0xf]
  %v71 = vld [vmem:[%s1 + $0x4c] sm:$0xf]
  %v72 = vld [vmem:[%s1 + $0x50] sm:$0xf]
  %v73 = vld [vmem:[%s1 + $0x54] sm:$0xf]
  %v74 = vld [vmem:[%s1 + $0x58] sm:$0xf]
  %v75 = vld [vmem:[%s1 + $0x5c] sm:$0xf]
  %v76 = vld [vmem:[%s1 + $0x60] sm:$0xf]
  %v77 = vld [vmem:[%s1 + $0x64] sm:$0xf]
  %v78 = vld [vmem:[%s1 + $0x68] sm:$0xf]
  %v79 = vld [vmem:[%s1 + $0x6c] sm:$0xf]
  %v80 = vld [vmem:[%s1 + $0x70] sm:$0xf]
  %v81 = vld [vmem:[%s1 + $0x74] sm:$0xf]
  %v82 = vld [vmem:[%s1 + $0x78] sm:$0xf]
  %v83 = vld [vmem:[%s1 + $0x7c] sm:$0xf]
  %v84 = vld [vmem:[%s1 + $0x80] sm:$0xf]
  %v85 = vld [vmem:[%s1 + $0x84] sm:$0xf]
  %v86 = vld [vmem:[%s1 + $0x88] sm:$0xf]
  %v87 = vld [vmem:[%s1 + $0x8c] sm:$0xf]
  %v88 = vld [vmem:[%s1 + $0x90] sm:$0xf]
  %v89 = vld [vmem:[%s1 + $0x94] sm:$0xf]
  %v90 = vld [vmem:[%s1 + $0x98] sm:$0xf]
  %v91 = vld [vmem:[%s1 + $0x9c] sm:$0xf]
  %v92 = vld [vmem:[%s1 + $0xa0] sm:$0xf]
  %v93 = vld [vmem:[%s1 + $0xa4] sm:$0xf]
  %v94 = vld [vmem:[%s1 + $0xa8] sm:$0xf]
  %v95 = vld [vmem:[%s1 + $0xac] sm:$0xf]
  %v96 = vld [vmem:[%s1 + $0xb0] sm:$0xf]
  %v97 = vld [vmem:[%s1 + $0xb4] sm:$0xf]
  %v98 = vld [vmem:[%s1 + $0xb8] sm:$0xf]
  %v99 = vld [vmem:[%s1 + $0xbc] sm:$0xf]
  %v100 = vld [vmem:[%s1 + $0xc0] sm:$0xf]
  %v101 = vld [vmem:[%s1 + $0xc4] sm:$0xf]
  %v102 = vld [vmem:[%s1 + $0xc8] sm:$0xf]
  %v103 = vld [vmem:[%s1 + $0xcc] sm:$0xf]
  %v104 = vld [vmem:[%s1 + $0xd0] sm:$0xf]
  %v105 = vld [vmem:[%s1 + $0xd4] sm:$0xf]
  %v106 = vld [vmem:[%s1 + $0xd8] sm:$0xf]
  %v107 = vld [vmem:[%s1 + $0xdc] sm:$0xf]
  %v108 = vld [vmem:[%s1 + $0xe0] sm:$0xf]
  %v109 = vld [vmem:[%s1 + $0xe4] sm:$0xf]
  %v110 = vld [vmem:[%s1 + $0xe8] sm:$0xf]
  %v111 = vld [vmem:[%s1 + $0xec] sm:$0xf]
  %v112 = vld [vmem:[%s1 + $0xf0] sm:$0xf]
  %v113 = vld [vmem:[%s1 + $0xf4] sm:$0xf]
  %v114 = vld [vmem:[%s1 + $0xf8] sm:$0xf]
  %v115 = vld [vmem:[%s1 + $0xfc] sm:$0xf]
  %v116 = vld [vmem:[%s1 + $0x100] sm:$0xf]
  %v117 = vld [vmem:[%s1 + $0x104] sm:$0xf]
  %v118 = vld [vmem:[%s1 + $0x108] sm:$0xf]
  %v119 = vld [vmem:[%s1 + $0x10c] sm:$0xf]
  %v120 = vld [vmem:[%s1 + $0x110] sm:$0xf]
  %v121 = vld [vmem:[%s1 + $0x114] sm:$0xf]
  %v122 = vld [vmem:[%s1 + $0x118] sm:$0xf]
  %v123 = vld [vmem:[%s1 + $0x11c] sm:$0xf]
  %v124 = vld [vmem:[%s1 + $0x120] sm:$0xf]
  %v125 = vld [vmem:[%s1 + $0x124] sm:$0xf]
  %v126 = vld [vmem:[%s1 + $0x128] sm:$0xf]
  %v127 = vld [vmem:[%s1 + $0x12c] sm:$0xf]
  %v128 = vld [vmem:[%s1 + $0x130] sm:$0xf]
  %v129 = vld [vmem:[%s1 + $0x134] sm:$0xf]
  %v130 = vld [vmem:[%s1 + $0x138] sm:$0xf]
  %v131 = vld [vmem:[%s1 + $0x13c] sm:$0xf]
  %v132 = vld [vmem:[%s1 + $0x140] sm:$0xf]
  %v133 = vld [vmem:[%s1 + $0x144] sm:$0xf]
  %v134 = vld [vmem:[%s1 + $0x148] sm:$0xf]
  %v135 = vld [vmem:[%s1 + $0x14c] sm:$0xf]
  %v136 = vld [vmem:[%s1 + $0x150] sm:$0xf]
  %v137 = vld [vmem:[%s1 + $0x154] sm:$0xf]
  %v138 = vld [vmem:[%s1 + $0x158] sm:$0xf]
  %v139 = vld [vmem:[%s1 + $0x15c] sm:$0xf]
  %v140 = vld [vmem:[%s1 + $0x160] sm:$0xf]
  %v141 = vld [vmem:[%s1 + $0x164] sm:$0xf]
  %v142 = vld [vmem:[%s1 + $0x168] sm:$0xf]
  %v143 = vld [vmem:[%s1 + $0x16c] sm:$0xf]
  %v144 = vld [vmem:[%s1 + $0x170] sm:$0xf]
  %v145 = vld [vmem:[%s1 + $0x174] sm:$0xf]
  %v146 = vld [vmem:[%s1 + $0x178] sm:$0xf]
  %v147 = vld [vmem:[%s1 + $0x17c] sm:$0xf]
  %v148 = vld [vmem:[%s1 + $0x180] sm:$0xf]
  %v149 = vld [vmem:[%s1 + $0x184] sm:$0xf]
  %v150 = vld [vmem:[%s1 + $0x188] sm:$0xf]
  %v151 = vld [vmem:[%s1 + $0x18c] sm:$0xf]
  %v152 = vld [vmem:[%s1 + $0x190] sm:$0xf]
  %v153 = vld [vmem:[%s1 + $0x194] sm:$0xf]
  %v154 = vld [vmem:[%s1 + $0x198] sm:$0xf]
  %v155 = vld [vmem:[%s1 + $0x19c] sm:$0xf]
  %v156 = vld [vmem:[%s1 + $0x1a0] sm:$0xf]
  %v157 = vld [vmem:[%s1 + $0x1a4] sm:$0xf]
  %v158 = vld [vmem:[%s1 + $0x1a8] sm:$0xf]
  %v159 = vld [vmem:[%s1 + $0x1ac] sm:$0xf]
  %v160 = vld [vmem:[%s1 + $0x1b0] sm:$0xf]
  %v161 = vld [vmem:[%s1 + $0x1b4] sm:$0xf]
  %v162 = vld [vmem:[%s1 + $0x1b8] sm:$0xf]
  %v163 = vld [vmem:[%s1 + $0x1bc] sm:$0xf]
  %v164 = vld [vmem:[%s1 + $0x1c0] sm:$0xf]
  %v165 = vld [vmem:[%s1 + $0x1c4] sm:$0xf]
  %v166 = vld [vmem:[%s1 + $0x1c8] sm:$0xf]
  %v167 = vld [vmem:[%s1 + $0x1cc] sm:$0xf]
  %v168 = vld [vmem:[%s1 + $0x1d0] sm:$0xf]
  %v169 = vld [vmem:[%s1 + $0x1d4] sm:$0xf]
  %v170 = vld [vmem:[%s1 + $0x1d8] sm:$0xf]
  %v171 = vld [vmem:[%s1 + $0x1dc] sm:$0xf]
  %v172 = vld [vmem:[%s1 + $0x1e0] sm:$0xf]
  %v173 = vld [vmem:[%s1 + $0x1e4] sm:$0xf]
  %v174 = vld [vmem:[%s1 + $0x1e8] sm:$0xf]
  %v175 = vld [vmem:[%s1 + $0x1ec] sm:$0xf]
  %v176 = vld [vmem:[%s1 + $0x1f0] sm:$0xf]
  %v177 = vld [vmem:[%s1 + $0x1f4] sm:$0xf]
  %v178 = vld [vmem:[%s1 + $0x1f8] sm:$0xf]
  %v179 = vld [vmem:[%s1 + $0x1fc] sm:$0xf]
  %v180 = vld [vmem:[%s2] sm:$0x1]
  %v182 = vperm.slane %v180, 0
  %v312 = vunpack.c.l.b16 %v52
  %v313 = vunpack.c.l.b16 %v53
  %v314 = vunpack.c.l.b16 %v54
  %v315 = vunpack.c.l.b16 %v55
  %v316 = vunpack.c.l.b16 %v56
  %v317 = vunpack.c.l.b16 %v57
  %v318 = vunpack.c.l.b16 %v58
  %v319 = vunpack.c.l.b16 %v59
  %v320 = vunpack.c.l.b16 %v60
  %v321 = vunpack.c.l.b16 %v61
  %v322 = vunpack.c.l.b16 %v62
  %v323 = vunpack.c.l.b16 %v63
  %v324 = vunpack.c.l.b16 %v64
  %v325 = vunpack.c.l.b16 %v65
  %v326 = vunpack.c.l.b16 %v66
  %v327 = vunpack.c.l.b16 %v67
  %v328 = vunpack.c.l.b16 %v68
  %v329 = vunpack.c.l.b16 %v69
  %v330 = vunpack.c.l.b16 %v70
  %v331 = vunpack.c.l.b16 %v71
  %v332 = vunpack.c.l.b16 %v72
  %v333 = vunpack.c.l.b16 %v73
  %v334 = vunpack.c.l.b16 %v74
  %v335 = vunpack.c.l.b16 %v75
  %v336 = vunpack.c.l.b16 %v76
  %v337 = vunpack.c.l.b16 %v77
  %v338 = vunpack.c.l.b16 %v78
  %v339 = vunpack.c.l.b16 %v79
  %v340 = vunpack.c.l.b16 %v80
  %v341 = vunpack.c.l.b16 %v81
  %v342 = vunpack.c.l.b16 %v82
  %v343 = vunpack.c.l.b16 %v83
  %v344 = vunpack.c.l.b16 %v84
  %v345 = vunpack.c.l.b16 %v85
  %v346 = vunpack.c.l.b16 %v86
  %v347 = vunpack.c.l.b16 %v87
  %v348 = vunpack.c.l.b16 %v88
  %v349 = vunpack.c.l.b16 %v89
  %v350 = vunpack.c.l.b16 %v90
  %v351 = vunpack.c.l.b16 %v91
  %v352 = vunpack.c.l.b16 %v92
  %v353 = vunpack.c.l.b16 %v93
  %v354 = vunpack.c.l.b16 %v94
  %v355 = vunpack.c.l.b16 %v95
  %v356 = vunpack.c.l.b16 %v96
  %v357 = vunpack.c.l.b16 %v97
  %v358 = vunpack.c.l.b16 %v98
  %v359 = vunpack.c.l.b16 %v99
  %v360 = vunpack.c.l.b16 %v100
  %v361 = vunpack.c.l.b16 %v101
  %v362 = vunpack.c.l.b16 %v102
  %v363 = vunpack.c.l.b16 %v103
  %v364 = vunpack.c.l.b16 %v104
  %v365 = vunpack.c.l.b16 %v105
  %v366 = vunpack.c.l.b16 %v106
  %v367 = vunpack.c.l.b16 %v107
  %v368 = vunpack.c.l.b16 %v108
  %v369 = vunpack.c.l.b16 %v109
  %v370 = vunpack.c.l.b16 %v110
  %v371 = vunpack.c.l.b16 %v111
  %v372 = vunpack.c.l.b16 %v112
  %v373 = vunpack.c.l.b16 %v113
  %v374 = vunpack.c.l.b16 %v114
  %v375 = vunpack.c.l.b16 %v115
  %v376 = vunpack.c.l.b16 %v116
  %v377 = vunpack.c.l.b16 %v117
  %v378 = vunpack.c.l.b16 %v118
  %v379 = vunpack.c.l.b16 %v119
  %v380 = vunpack.c.l.b16 %v120
  %v381 = vunpack.c.l.b16 %v121
  %v382 = vunpack.c.l.b16 %v122
  %v383 = vunpack.c.l.b16 %v123
  %v384 = vunpack.c.l.b16 %v124
  %v385 = vunpack.c.l.b16 %v125
  %v386 = vunpack.c.l.b16 %v126
  %v387 = vunpack.c.l.b16 %v127
  %v388 = vunpack.c.l.b16 %v128
  %v389 = vunpack.c.l.b16 %v129
  %v390 = vunpack.c.l.b16 %v130
  %v391 = vunpack.c.l.b16 %v131
  %v392 = vunpack.c.l.b16 %v132
  %v393 = vunpack.c.l.b16 %v133
  %v394 = vunpack.c.l.b16 %v134
  %v395 = vunpack.c.l.b16 %v135
  %v396 = vunpack.c.l.b16 %v136
  %v397 = vunpack.c.l.b16 %v137
  %v398 = vunpack.c.l.b16 %v138
  %v399 = vunpack.c.l.b16 %v139
  %v400 = vunpack.c.l.b16 %v140
  %v401 = vunpack.c.l.b16 %v141
  %v402 = vunpack.c.l.b16 %v142
  %v403 = vunpack.c.l.b16 %v143
  %v404 = vunpack.c.l.b16 %v144
  %v405 = vunpack.c.l.b16 %v145
  %v406 = vunpack.c.l.b16 %v146
  %v407 = vunpack.c.l.b16 %v147
  %v408 = vunpack.c.l.b16 %v148
  %v409 = vunpack.c.l.b16 %v149
  %v410 = vunpack.c.l.b16 %v150
  %v411 = vunpack.c.l.b16 %v151
  %v412 = vunpack.c.l.b16 %v152
  %v413 = vunpack.c.l.b16 %v153
  %v414 = vunpack.c.l.b16 %v154
  %v415 = vunpack.c.l.b16 %v155
  %v416 = vunpack.c.l.b16 %v156
  %v417 = vunpack.c.l.b16 %v157
  %v418 = vunpack.c.l.b16 %v158
  %v419 = vunpack.c.l.b16 %v159
  %v420 = vunpack.c.l.b16 %v160
  %v421 = vunpack.c.l.b16 %v161
  %v422 = vunpack.c.l.b16 %v162
  %v423 = vunpack.c.l.b16 %v163
  %v424 = vunpack.c.l.b16 %v164
  %v425 = vunpack.c.l.b16 %v165
  %v426 = vunpack.c.l.b16 %v166
  %v427 = vunpack.c.l.b16 %v167
  %v428 = vunpack.c.l.b16 %v168
  %v429 = vunpack.c.l.b16 %v169
  %v430 = vunpack.c.l.b16 %v170
  %v431 = vunpack.c.l.b16 %v171
  %v432 = vunpack.c.l.b16 %v172
  %v433 = vunpack.c.l.b16 %v173
  %v434 = vunpack.c.l.b16 %v174
  %v435 = vunpack.c.l.b16 %v175
  %v436 = vunpack.c.l.b16 %v176
  %v437 = vunpack.c.l.b16 %v177
  %v438 = vunpack.c.l.b16 %v178
  %v439 = vunpack.c.l.b16 %v179
  %v440 = vpack.c.b16 %v313, %v312
  %v441 = vpack.c.b16 %v315, %v314
  %v442 = vpack.c.b16 %v317, %v316
  %v443 = vpack.c.b16 %v319, %v318
  %v444 = vpack.c.b16 %v321, %v320
  %v445 = vpack.c.b16 %v323, %v322
  %v446 = vpack.c.b16 %v325, %v324
  %v447 = vpack.c.b16 %v327, %v326
  %v448 = vpack.c.b16 %v329, %v328
  %v449 = vpack.c.b16 %v331, %v330
  %v450 = vpack.c.b16 %v333, %v332
  %v451 = vpack.c.b16 %v335, %v334
  %v452 = vpack.c.b16 %v337, %v336
  %v453 = vpack.c.b16 %v339, %v338
  %v454 = vpack.c.b16 %v341, %v340
  %v455 = vpack.c.b16 %v343, %v342
  %v456 = vpack.c.b16 %v345, %v344
  %v457 = vpack.c.b16 %v347, %v346
  %v458 = vpack.c.b16 %v349, %v348
  %v459 = vpack.c.b16 %v351, %v350
  %v460 = vpack.c.b16 %v353, %v352
  %v461 = vpack.c.b16 %v355, %v354
  %v462 = vpack.c.b16 %v357, %v356
  %v463 = vpack.c.b16 %v359, %v358
  %v464 = vpack.c.b16 %v361, %v360
  %v465 = vpack.c.b16 %v363, %v362
  %v466 = vpack.c.b16 %v365, %v364
  %v467 = vpack.c.b16 %v367, %v366
  %v468 = vpack.c.b16 %v369, %v368
  %v469 = vpack.c.b16 %v371, %v370
  %v470 = vpack.c.b16 %v373, %v372
  %v471 = vpack.c.b16 %v375, %v374
  %v472 = vpack.c.b16 %v377, %v376
  %v473 = vpack.c.b16 %v379, %v378
  %v474 = vpack.c.b16 %v381, %v380
  %v475 = vpack.c.b16 %v383, %v382
  %v476 = vpack.c.b16 %v385, %v384
  %v477 = vpack.c.b16 %v387, %v386
  %v478 = vpack.c.b16 %v389, %v388
  %v479 = vpack.c.b16 %v391, %v390
  %v480 = vpack.c.b16 %v393, %v392
  %v481 = vpack.c.b16 %v395, %v394
  %v482 = vpack.c.b16 %v397, %v396
  %v483 = vpack.c.b16 %v399, %v398
  %v484 = vpack.c.b16 %v401, %v400
  %v485 = vpack.c.b16 %v403, %v402
  %v486 = vpack.c.b16 %v405, %v404
  %v487 = vpack.c.b16 %v407, %v406
  %v488 = vpack.c.b16 %v409, %v408
  %v489 = vpack.c.b16 %v411, %v410
  %v490 = vpack.c.b16 %v413, %v412
  %v491 = vpack.c.b16 %v415, %v414
  %v492 = vpack.c.b16 %v417, %v416
  %v493 = vpack.c.b16 %v419, %v418
  %v494 = vpack.c.b16 %v421, %v420
  %v495 = vpack.c.b16 %v423, %v422
  %v496 = vpack.c.b16 %v425, %v424
  %v497 = vpack.c.b16 %v427, %v426
  %v498 = vpack.c.b16 %v429, %v428
  %v499 = vpack.c.b16 %v431, %v430
  %v500 = vpack.c.b16 %v433, %v432
  %v501 = vpack.c.b16 %v435, %v434
  %v502 = vpack.c.b16 %v437, %v436
  %v503 = vpack.c.b16 %v439, %v438
  %568 = vmatpush.bf16.msra.mxu0 %v447
  %569 = vmatpush.bf16.msra.mxu0 %v446
  %570 = vmatpush.bf16.msra.mxu0 %v445
  %571 = vmatpush.bf16.msra.mxu0 %v444
  %572 = vmatpush.bf16.msra.mxu0 %v443
  %573 = vmatpush.bf16.msra.mxu0 %v442
  %574 = vmatpush.bf16.msra.mxu0 %v441
  %575 = vmatpush.bf16.msra.mxu0 %v440
  %576 = vmatmul.bf16.gmra.mxu0 %v44
  %v577 = vpop.f32.mrf.mxu0
  %v578 = vadd.f32 %v182, %v577
  %v579 = vpop.f32.mrf.mxu0
  %580 = vdwg.mxu0
  %581 = vmatpush.bf16.msra.mxu0 %v455
  %582 = vmatpush.bf16.msra.mxu0 %v454
  %583 = vmatpush.bf16.msra.mxu0 %v453
  %584 = vmatpush.bf16.msra.mxu0 %v452
  %585 = vmatpush.bf16.msra.mxu0 %v451
  %586 = vmatpush.bf16.msra.mxu0 %v450
  %587 = vmatpush.bf16.msra.mxu0 %v449
  %588 = vmatpush.bf16.msra.mxu0 %v448
  %589 = vmatmul.bf16.gmra.mxu0 %v45
  %v590 = vpop.f32.mrf.mxu0
  %v591 = vadd.f32 %v578, %v590
  %v592 = vpop.f32.mrf.mxu0
  %593 = vdwg.mxu0
  %594 = vmatpush.bf16.msra.mxu0 %v463
  %595 = vmatpush.bf16.msra.mxu0 %v462
  %596 = vmatpush.bf16.msra.mxu0 %v461
  %597 = vmatpush.bf16.msra.mxu0 %v460
  %598 = vmatpush.bf16.msra.mxu0 %v459
  %599 = vmatpush.bf16.msra.mxu0 %v458
  %600 = vmatpush.bf16.msra.mxu0 %v457
  %601 = vmatpush.bf16.msra.mxu0 %v456
  %602 = vmatmul.bf16.gmra.mxu0 %v46
  %v603 = vpop.f32.mrf.mxu0
  %v604 = vadd.f32 %v591, %v603
  %v605 = vpop.f32.mrf.mxu0
  %606 = vdwg.mxu0
  %607 = vmatpush.bf16.msra.mxu0 %v471
  %608 = vmatpush.bf16.msra.mxu0 %v470
  %609 = vmatpush.bf16.msra.mxu0 %v469
  %610 = vmatpush.bf16.msra.mxu0 %v468
  %611 = vmatpush.bf16.msra.mxu0 %v467
  %612 = vmatpush.bf16.msra.mxu0 %v466
  %613 = vmatpush.bf16.msra.mxu0 %v465
  %614 = vmatpush.bf16.msra.mxu0 %v464
  %615 = vmatmul.bf16.gmra.mxu0 %v47
  %v616 = vpop.f32.mrf.mxu0
  %v617 = vadd.f32 %v604, %v616
  %v618 = vpop.f32.mrf.mxu0
  %619 = vdwg.mxu0
  %620 = vmatpush.bf16.msra.mxu0 %v479
  %621 = vmatpush.bf16.msra.mxu0 %v478
  %622 = vmatpush.bf16.msra.mxu0 %v477
  %623 = vmatpush.bf16.msra.mxu0 %v476
  %624 = vmatpush.bf16.msra.mxu0 %v475
  %625 = vmatpush.bf16.msra.mxu0 %v474
  %626 = vmatpush.bf16.msra.mxu0 %v473
  %627 = vmatpush.bf16.msra.mxu0 %v472
  %628 = vmatmul.bf16.gmra.mxu0 %v48
  %v629 = vpop.f32.mrf.mxu0
  %v630 = vadd.f32 %v617, %v629
  %v631 = vpop.f32.mrf.mxu0
  %632 = vdwg.mxu0
  %633 = vmatpush.bf16.msra.mxu0 %v487
  %634 = vmatpush.bf16.msra.mxu0 %v486
  %635 = vmatpush.bf16.msra.mxu0 %v485
  %636 = vmatpush.bf16.msra.mxu0 %v484
  %637 = vmatpush.bf16.msra.mxu0 %v483
  %638 = vmatpush.bf16.msra.mxu0 %v482
  %639 = vmatpush.bf16.msra.mxu0 %v481
  %640 = vmatpush.bf16.msra.mxu0 %v480
  %641 = vmatmul.bf16.gmra.mxu0 %v49
  %v642 = vpop.f32.mrf.mxu0
  %v643 = vadd.f32 %v630, %v642
  %v644 = vpop.f32.mrf.mxu0
  %645 = vdwg.mxu0
  %646 = vmatpush.bf16.msra.mxu0 %v495
  %647 = vmatpush.bf16.msra.mxu0 %v494
  %648 = vmatpush.bf16.msra.mxu0 %v493
  %649 = vmatpush.bf16.msra.mxu0 %v492
  %650 = vmatpush.bf16.msra.mxu0 %v491
  %651 = vmatpush.bf16.msra.mxu0 %v490
  %652 = vmatpush.bf16.msra.mxu0 %v489
  %653 = vmatpush.bf16.msra.mxu0 %v488
  %654 = vmatmul.bf16.gmra.mxu0 %v50
  %v655 = vpop.f32.mrf.mxu0
  %v656 = vadd.f32 %v643, %v655
  %v657 = vpop.f32.mrf.mxu0
  %658 = vdwg.mxu0
  %659 = vmatpush.bf16.msra.mxu0 %v503
  %660 = vmatpush.bf16.msra.mxu0 %v502
  %661 = vmatpush.bf16.msra.mxu0 %v501
  %662 = vmatpush.bf16.msra.mxu0 %v500
  %663 = vmatpush.bf16.msra.mxu0 %v499
  %664 = vmatpush.bf16.msra.mxu0 %v498
  %665 = vmatpush.bf16.msra.mxu0 %v497
  %666 = vmatpush.bf16.msra.mxu0 %v496
  %667 = vmatmul.bf16.gmra.mxu0 %v51
  %v668 = vpop.f32.mrf.mxu0
  %v669 = vadd.f32 %v656, %v668
  %v670 = vpop.f32.mrf.mxu0
  %671 = vdwg.mxu0
  %v672 = vmax.f32 %v669, 0.0
  %v673 = vld [vmem:[%s3] sm:$0x1]
  %v675 = vperm.slane %v673, 0
  %v677 = vmul.f32 %v672, %v675
  %vm678 = vcmask 254976
  %v679 = vsel %vm678, %v677, 0.0
  %680 = vadd.xlane.f32.xlu0 %v679
  %v681 = vpop.xlane.xlu0 %680
  %s682 = sld [smem:[#allocation2]]
  %v683 = vstv %s682
  %v684 = vadd.f32 %v681, %v683
  %vm685 = vcmask 1024
  %686 = vst.msk [vmem:[%s5] sm:$0x3] %vm685, %v684
  // Predicated region
  $region22: #{tpu_custom_call.1} parent=0 // pred_check
    _
  $region23: #{tpu_custom_call.1} parent=0 // pred_check_branch
    %688 = sbr.rel (0) target = $region25
  $region24: #{tpu_custom_call.1} parent=0 // pred_region
    _
  $region25: #{tpu_custom_call.1} parent=0 // pred_fallthru
    _
  // Predicated region
  $region26: #{tpu_custom_call.1} parent=0 // pred_check
    _
  $region27: #{tpu_custom_call.1} parent=0 // pred_check_branch
    %690 = sbr.rel (0) target = $region29
  $region28: #{tpu_custom_call.1} parent=0 // pred_region
    _
  $region29: #{tpu_custom_call.1} parent=0 // pred_fallthru
    _

</llo_original>
